<compile_context>
chip_gen: v6e
topology: v6e:2x2x1
jax: 0.10.0
libtpu: 0.0.40
codegen_flags: <defaults>
</compile_context>

<pallas_src>
import math

import jax
import jax.numpy as jnp
from jax.experimental import pallas as pl
from jax.experimental.pallas import tpu as pltpu


# ---------------------------------------------------------------------------
# Primary: zero-traffic pass-through (output aliases input, nothing moves).
# ---------------------------------------------------------------------------
def _passthrough_kernel(x_ref, o_ref):
    # Output buffer IS the input buffer; just pin the ordering dependency.
    del x_ref
    pltpu.touch(o_ref)


def identity_passthrough(x: jax.Array) -> jax.Array:
    return pl.pallas_call(
        _passthrough_kernel,
        out_shape=jax.ShapeDtypeStruct(x.shape, x.dtype),
        in_specs=[pl.BlockSpec(memory_space=pl.ANY)],
        out_specs=pl.BlockSpec(memory_space=pl.ANY),
        input_output_aliases={0: 0},
    )(x)


# ---------------------------------------------------------------------------
# Fallback: lane-dense tiled memcpy (only used if the pass-through cannot be
# lowered on the current backend).
# ---------------------------------------------------------------------------
def _copy_kernel(x_ref, o_ref):
    o_ref[...] = x_ref[...]


_LANE_CANDIDATES = (2048, 1024, 512, 256, 128)
# (in + out) x 2 pipeline buffers x 2 MiB = 8 MiB -> safe on v5e's 16 MiB
# scoped-VMEM default, v6e's 32 MiB default and v7x's 64 MiB physical VMEM.
_MAX_TILE_BYTES = 2 * 1024 * 1024


def identity_copy(x: jax.Array) -> jax.Array:
    orig_shape = x.shape
    total = math.prod(orig_shape) if orig_shape else 1
    if total == 0:
        return x

    itemsize = jnp.dtype(x.dtype).itemsize
    # Packed-sublane row granularity: 8 rows/vreg for 32-bit, 16 for bf16,
    # 32 for int8/fp8 — avoids masked packed-row stores on boundary tiles.
    sub = 8 * max(1, 4 // itemsize)

    # Choose the widest lane count that divides the element count and still
    # leaves at least one full vreg worth of rows.
    lane = None
    for cand in _LANE_CANDIDATES:
        if total % cand == 0 and total // cand >= sub:
            lane = cand
            break
    if lane is None:
        for cand in _LANE_CANDIDATES:
            if total % cand == 0:
                lane = cand
                break

    flat = x.reshape(-1)
    pad = 0
    if lane is None:
        # Awkward element count: pad up to an aligned slab instead of the old
        # (1, total) single block (bad sublane occupancy, v7x VMEM risk).
        lane = 128
        chunk = sub * lane
        padded = pl.cdiv(total, chunk) * chunk
        pad = padded - total
        if pad:
            flat = jnp.concatenate([flat, jnp.zeros((pad,), dtype=x.dtype)])
    rows = (total + pad) // lane
    x2 = flat.reshape(rows, lane)

    # Largest row tile that fits the per-ref byte budget (no artificial row cap).
    rows_by_vmem = max(1, _MAX_TILE_BYTES // (lane * itemsize))
    tile_rows = min(rows, rows_by_vmem)
    if tile_rows < rows:
        tile_rows = max(sub, (tile_rows // sub) * sub)
    grid = (pl.cdiv(rows, tile_rows),)

    out2 = pl.pallas_call(
        _copy_kernel,
        out_shape=jax.ShapeDtypeStruct((rows, lane), x.dtype),
        grid_spec=pl.GridSpec(
            grid=grid,
            in_specs=[pl.BlockSpec((tile_rows, lane), lambda i: (i, 0))],
            out_specs=pl.BlockSpec((tile_rows, lane), lambda i: (i, 0)),
        ),
        compiler_params=pltpu.CompilerParams(
            dimension_semantics=("parallel",),
        ),
    )(x2)

    out = out2.reshape(-1)
    if pad:
        out = out[:total]
    return out.reshape(orig_shape)


def identity(x: jax.Array) -> jax.Array:
    """Pallas equivalent of nn.Identity().forward(x)."""
    if x.size == 0:
        return x
    return identity_passthrough(x)


if __name__ == "__main__":
    key = jax.random.PRNGKey(0)
    # Small NCHW input consistent with a typical conv-style module input.
    x = jax.random.normal(key, (2, 4, 16, 16), dtype=jnp.float32)

    y = None
    try:
        fn = jax.jit(identity)
        y = fn(x)
        jax.block_until_ready(y)
        if not bool(jnp.array_equal(y, x)):
            y = None
    except Exception:
        y = None

    if y is None:
        # Pass-through path unavailable on this backend; use the tiled memcpy.
        fn = jax.jit(identity_copy)
        y = fn(x)
        jax.block_until_ready(y)

    assert y.shape == x.shape and y.dtype == x.dtype
    assert bool(jnp.array_equal(y, x))

    print("KERNEL_OK")
</pallas_src>

<mosaic_0001>
module attributes {stable_mosaic.version = 11 : i64} {
  func.func @_passthrough_kernel(%arg0: memref<2x4x16x16xf32, #tpu.memory_space<any>>, %arg1: memref<2x4x16x16xf32, #tpu.memory_space<any>>) attributes {dimension_semantics = [], scalar_prefetch = 0 : i64, scratch_operands = 0 : i64, tpu.core_type = #tpu.core_type<tc>} {
    return
  }
}

module attributes {stable_mosaic.version = 11 : i64} {
  func.func @_copy_kernel(%arg0: i32, %arg1: memref<8x256xf32, #tpu.memory_space<vmem>>, %arg2: memref<8x256xf32, #tpu.memory_space<vmem>>) attributes {dimension_semantics = [#tpu.dimension_semantics<parallel>], iteration_bounds = array<i64: 1>, scalar_prefetch = 0 : i64, scratch_operands = 0 : i64, tpu.core_type = #tpu.core_type<tc>, window_params = [{transform_indices = @transform_0, window_bounds = array<i64: 8, 256>}, {transform_indices = @transform_1, window_bounds = array<i64: 8, 256>}]} {
    %c0 = arith.constant 0 : index
    %c0_0 = arith.constant 0 : index
    %0 = vector.load %arg1[%c0, %c0_0] : memref<8x256xf32, #tpu.memory_space<vmem>>, vector<8x256xf32>
    %c0_1 = arith.constant 0 : index
    %c0_2 = arith.constant 0 : index
    %1 = vector.load %arg2[%c0_1, %c0_2] : memref<8x256xf32, #tpu.memory_space<vmem>>, vector<8x256xf32>
    tpu.vector_store %arg2[%c0_1, %c0_2], %0 {strides = array<i32>} : memref<8x256xf32, #tpu.memory_space<vmem>>, vector<8x256xf32>,
    return
  }
  func.func @transform_0(%arg0: i32) -> (i32, i32) {
    %c0_i32 = arith.constant 0 : i32
    %c0_i32_0 = arith.constant 0 : i32
    return %arg0, %c0_i32 : i32, i32
  }
  func.func @transform_1(%arg0: i32) -> (i32, i32) {
    %c0_i32 = arith.constant 0 : i32
    %c0_i32_0 = arith.constant 0 : i32
    return %arg0, %c0_i32 : i32, i32
  }
}

</mosaic_0001>

<llo_original>
// kernel: identity.1
$region0: #{identity.1}
  #allocation0 [shape = 'u32[]', space=smem, size = 0x4, offset = 0x4, fixed_abs, tag = 'smem constant byte address 0x4 - core index']
  #allocation1 [shape = 'u32[144,128]{1,0:T(1,128)}', space=vmem, size = 0x12000, scoped, tag = 'internal scratch']
  %s0 = inlined_call_operand.hbm [shape: f32[2,4,16,16], index: 0, kind: input, shape index: {}, may-alias: {0,1}]
  %s1 = inlined_call_operand.hbm [shape: f32[2,4,16,16], index: 1, kind: output, shape index: {}, may-alias: {0,1}]
  %s2 = sld [smem:[#allocation0]]
  $region2: #{identity.1} parent=0
    _
  %s4 = ssub.s32 1, %s2
  %s5 = scalar_select 0, %s4, %s2

// kernel: identity_copy.1
$region0: #{identity_copy.1}
  #allocation0 [shape = 'u32[]', space=smem, size = 0x4, offset = 0x4, fixed_abs, tag = 'smem constant byte address 0x4 - core index']
  #allocation1 [shape = 'u32[144,128]{1,0:T(1,128)}', space=vmem, size = 0x12000, scoped, tag = 'internal scratch']
  %s0 = inlined_call_operand.vmem [shape: f32[8,256], index: 0, kind: input, shape index: {}]
  %s1 = inlined_call_operand.vmem [shape: f32[8,256], index: 1, kind: output, shape index: {}]
  %s2 = sld [smem:[#allocation0]]
  $region14: #{identity_copy.1} parent=0
    _
  %s4 = ssub.s32 1, %s2
  %s5 = scalar_select 0, %s4, %s2
  // Predicated region
  $region2: #{identity_copy.1} parent=0 // pred_check
    _
  $region3: #{identity_copy.1} parent=0 // pred_check_branch
    %7 = sbr.rel (0) target = $region5
  $region4: #{identity_copy.1} parent=0 // pred_region
    _
  $region5: #{identity_copy.1} parent=0 // pred_fallthru
    _
  %v8 = vld [vmem:[%s0] sm:$0xff]
  %v9 = vld [vmem:[%s0 + $0x8] sm:$0xff]
  %10 = vst [vmem:[%s1] sm:$0xff] %v8
  %11 = vst [vmem:[%s1 + $0x8] sm:$0xff] %v9
  // Predicated region
  $region6: #{identity_copy.1} parent=0 // pred_check
    _
  $region7: #{identity_copy.1} parent=0 // pred_check_branch
    %13 = sbr.rel (0) target = $region9
  $region8: #{identity_copy.1} parent=0 // pred_region
    _
  $region9: #{identity_copy.1} parent=0 // pred_fallthru
    _
  // Predicated region
  $region10: #{identity_copy.1} parent=0 // pred_check
    _
  $region11: #{identity_copy.1} parent=0 // pred_check_branch
    %15 = sbr.rel (0) target = $region13
  $region12: #{identity_copy.1} parent=0 // pred_region
    _
  $region13: #{identity_copy.1} parent=0 // pred_fallthru
    _

</llo_original>
